<compile_context>
chip_gen: v7x
topology: tpu7x:2x2x1
jax: 0.10.0
libtpu: 0.0.40
codegen_flags: <defaults>
</compile_context>

<pallas_src>
import functools

import jax
import jax.numpy as jnp
from jax.experimental import pallas as pl
from jax.experimental.pallas import tpu as pltpu


def _round_up(x, m):
    return (x + m - 1) // m * m


def _vmem_estimate_bytes(tn, in1, in2, out, itemsize=4):
    # double-buffered a/b/out tiles + (double-buffered) resident weights & bias
    return itemsize * (2 * tn * (in1 + in2 + out) + 2 * ((in1 + in2) * out + out))


def _choose_tile_n(n, in1, in2, out, itemsize=4):
    """Row-tile size: multiple of 8 (sublane); for large N a multiple of 256
    (MXU cadence) with >=2 grid steps so v7x's two TensorCores both get work."""
    if n <= 256:
        return max(8, _round_up(n, 8))
    tn = 512 if n >= 1024 else 256
    # Keep the working set comfortably inside VMEM on every generation.
    while tn > 256 and _vmem_estimate_bytes(tn, in1, in2, out, itemsize) > 48 * 1024 * 1024:
        tn //= 2
    return tn


def _merge_kernel(a_ref, b_ref, w1_ref, w2_ref, bias_ref, o_ref, *, activation):
    # Two MXU contractions fused via the shared f32 accumulator.
    acc = jnp.dot(a_ref[...], w1_ref[...], preferred_element_type=jnp.float32)
    acc = acc + jnp.dot(b_ref[...], w2_ref[...], preferred_element_type=jnp.float32)
    acc = acc + bias_ref[...]
    if activation is not None:
        acc = activation(acc)
    o_ref[...] = acc.astype(o_ref.dtype)


def prepare_merge_params(w1, b1, w2, b2):
    """One-time parameter prep (hoist out of the per-call forward path).

    w1: [out, in1], b1: [out], w2: [out, in2], b2: [out]  (PyTorch convention)
    returns w1t: [in1, out], w2t: [in2, out], bias: [1, out]
    """
    out = w1.shape[0]
    return w1.T, w2.T, (b1 + b2).reshape(1, out)


def merge_apply(a, b, w1t, w2t, bias, activation=None, *, tile_n=None):
    """a: [N, in1], b: [N, in2], w1t: [in1, out], w2t: [in2, out], bias: [1, out]."""
    n, in1 = a.shape
    in2 = b.shape[1]
    out = w1t.shape[1]
    k = in1 + in2

    tn = tile_n if tile_n is not None else _choose_tile_n(n, in1, in2, out)
    tn = max(8, _round_up(tn, 8))
    grid = (pl.cdiv(n, tn),)

    # Raise the scoped VMEM limit only when the working set actually needs it
    # (defaults: 16 MiB v5e, 32 MiB v6e/v7x).
    est = _vmem_estimate_bytes(tn, in1, in2, out)
    vmem_limit = None
    if est > 12 * 1024 * 1024:
        vmem_limit = min(int(est * 1.5), 64 * 1024 * 1024)

    itemsize = jnp.dtype(a.dtype).itemsize
    cost = pl.CostEstimate(
        flops=2 * n * k * out,
        transcendentals=(n * out if activation is not None else 0),
        bytes_accessed=itemsize * (n * k + k * out + out + n * out),
    )

    kernel = functools.partial(_merge_kernel, activation=activation)

    return pl.pallas_call(
        kernel,
        out_shape=jax.ShapeDtypeStruct((n, out), a.dtype),
        grid_spec=pltpu.PrefetchScalarGridSpec(
            num_scalar_prefetch=0,
            grid=grid,
            in_specs=[
                pl.BlockSpec((tn, in1), lambda i: (i, 0)),   # a tile (pipelined)
                pl.BlockSpec((tn, in2), lambda i: (i, 0)),   # b tile (pipelined)
                pl.BlockSpec((in1, out), lambda i: (0, 0)),  # w1^T (VMEM-resident)
                pl.BlockSpec((in2, out), lambda i: (0, 0)),  # w2^T (VMEM-resident)
                pl.BlockSpec((1, out), lambda i: (0, 0)),    # fused bias (resident)
            ],
            out_specs=pl.BlockSpec((tn, out), lambda i: (i, 0)),
        ),
        compiler_params=pltpu.CompilerParams(
            dimension_semantics=("parallel",),
            vmem_limit_bytes=vmem_limit,
        ),
        cost_estimate=cost,
    )(a, b, w1t, w2t, bias)


def merge_forward(a, b, w1, b1, w2, b2, activation=None, *, tile_n=None):
    """Pallas equivalent of Merge(in1, in2, out, activation).forward(a, b)."""
    w1t, w2t, bias = prepare_merge_params(w1, b1, w2, b2)
    return merge_apply(a, b, w1t, w2t, bias, activation=activation, tile_n=tile_n)


def merge_reference(a, b, w1, b1, w2, b2, activation=None):
    pc = a @ w1.T + b1 + b @ w2.T + b2
    if activation is not None:
        pc = activation(pc)
    return pc


if __name__ == "__main__":
    # Small shapes: batch=8, in_features1=16, in_features2=24, out_features=32
    N, IN1, IN2, OUT = 8, 16, 24, 32

    key = jax.random.PRNGKey(0)
    k_a, k_b, k_w1, k_b1, k_w2, k_b2 = jax.random.split(key, 6)

    a = jax.random.normal(k_a, (N, IN1), dtype=jnp.float32)
    b = jax.random.normal(k_b, (N, IN2), dtype=jnp.float32)

    # Deterministic parameter init (PyTorch nn.Linear shapes: W=[out,in], b=[out])
    bound1 = 1.0 / (IN1 ** 0.5)
    bound2 = 1.0 / (IN2 ** 0.5)
    w1 = jax.random.uniform(k_w1, (OUT, IN1), jnp.float32, -bound1, bound1)
    b1 = jax.random.uniform(k_b1, (OUT,), jnp.float32, -bound1, bound1)
    w2 = jax.random.uniform(k_w2, (OUT, IN2), jnp.float32, -bound2, bound2)
    b2 = jax.random.uniform(k_b2, (OUT,), jnp.float32, -bound2, bound2)

    # Default module config: activation=None, single tile (grid = 1)
    out = merge_forward(a, b, w1, b1, w2, b2, activation=None)
    out = jax.block_until_ready(out)
    ref = merge_reference(a, b, w1, b1, w2, b2, activation=None)
    assert out.shape == (N, OUT)
    assert jnp.allclose(out, ref, atol=1e-5, rtol=1e-5)

    # Larger batch: exercises multi-step grid, ragged last tile, and activation.
    N2 = 1000
    k_a2, k_b2x = jax.random.split(jax.random.PRNGKey(1), 2)
    a2 = jax.random.normal(k_a2, (N2, IN1), dtype=jnp.float32)
    b2_in = jax.random.normal(k_b2x, (N2, IN2), dtype=jnp.float32)
    out2 = merge_forward(a2, b2_in, w1, b1, w2, b2, activation=jnp.tanh)
    out2 = jax.block_until_ready(out2)
    ref2 = merge_reference(a2, b2_in, w1, b1, w2, b2, activation=jnp.tanh)
    assert out2.shape == (N2, OUT)
    assert jnp.allclose(out2, ref2, atol=1e-5, rtol=1e-5)

    print("KERNEL_OK")
</pallas_src>

<mosaic_0001>
module attributes {stable_mosaic.version = 11 : i64} {
  func.func @_merge_kernel(%arg0: i32, %arg1: memref<8x16xf32, #tpu.memory_space<vmem>>, %arg2: memref<8x24xf32, #tpu.memory_space<vmem>>, %arg3: memref<16x32xf32, #tpu.memory_space<vmem>>, %arg4: memref<24x32xf32, #tpu.memory_space<vmem>>, %arg5: memref<1x32xf32, #tpu.memory_space<vmem>>, %arg6: memref<8x32xf32, #tpu.memory_space<vmem>>) attributes {dimension_semantics = [#tpu.dimension_semantics<parallel>], iteration_bounds = array<i64: 1>, scalar_prefetch = 0 : i64, scratch_operands = 0 : i64, tpu.core_type = #tpu.core_type<tc>, window_params = [{transform_indices = @transform_0, window_bounds = array<i64: 8, 16>}, {transform_indices = @transform_1, window_bounds = array<i64: 8, 24>}, {pipeline_mode = #tpu.pipeline_mode<synchronous>, transform_indices = @transform_2, window_bounds = array<i64: 16, 32>}, {pipeline_mode = #tpu.pipeline_mode<synchronous>, transform_indices = @transform_3, window_bounds = array<i64: 24, 32>}, {pipeline_mode = #tpu.pipeline_mode<synchronous>, transform_indices = @transform_4, window_bounds = array<i64: 1, 32>}, {transform_indices = @transform_5, window_bounds = array<i64: 8, 32>}]} {
    %c0 = arith.constant 0 : index
    %c0_0 = arith.constant 0 : index
    %0 = vector.load %arg1[%c0, %c0_0] : memref<8x16xf32, #tpu.memory_space<vmem>>, vector<8x16xf32>
    %c0_1 = arith.constant 0 : index
    %c0_2 = arith.constant 0 : index
    %1 = vector.load %arg3[%c0_1, %c0_2] : memref<16x32xf32, #tpu.memory_space<vmem>>, vector<16x32xf32>
    %cst = arith.constant dense<0.000000e+00> : vector<8x32xf32>
    %2 = tpu.matmul %0, %1, %cst {dimension_numbers = #tpu.dot_dimension_numbers<[1], [0], [0], [1], [0, 0, 1, 1], [], []>} : vector<8x16xf32>, vector<16x32xf32>, vector<8x32xf32> -> vector<8x32xf32>
    %c0_3 = arith.constant 0 : index
    %c0_4 = arith.constant 0 : index
    %3 = vector.load %arg2[%c0_3, %c0_4] : memref<8x24xf32, #tpu.memory_space<vmem>>, vector<8x24xf32>
    %c0_5 = arith.constant 0 : index
    %c0_6 = arith.constant 0 : index
    %4 = vector.load %arg4[%c0_5, %c0_6] : memref<24x32xf32, #tpu.memory_space<vmem>>, vector<24x32xf32>
    %cst_7 = arith.constant dense<0.000000e+00> : vector<8x32xf32>
    %5 = tpu.matmul %3, %4, %cst_7 {dimension_numbers = #tpu.dot_dimension_numbers<[1], [0], [0], [1], [0, 0, 1, 1], [], []>} : vector<8x24xf32>, vector<24x32xf32>, vector<8x32xf32> -> vector<8x32xf32>
    %6 = arith.addf %2, %5 : vector<8x32xf32>
    %c0_8 = arith.constant 0 : index
    %c0_9 = arith.constant 0 : index
    %7 = vector.load %arg5[%c0_8, %c0_9] : memref<1x32xf32, #tpu.memory_space<vmem>>, vector<1x32xf32>
    %8 = vector.broadcast %7 : vector<1x32xf32> to vector<8x32xf32>
    %9 = arith.addf %6, %8 : vector<8x32xf32>
    %c0_10 = arith.constant 0 : index
    %c0_11 = arith.constant 0 : index
    %10 = vector.load %arg6[%c0_10, %c0_11] : memref<8x32xf32, #tpu.memory_space<vmem>>, vector<8x32xf32>
    tpu.vector_store %arg6[%c0_10, %c0_11], %9 {strides = array<i32>} : memref<8x32xf32, #tpu.memory_space<vmem>>, vector<8x32xf32>,
    return
  }
  func.func @transform_0(%arg0: i32) -> (i32, i32) {
    %c0_i32 = arith.constant 0 : i32
    %c0_i32_0 = arith.constant 0 : i32
    return %arg0, %c0_i32 : i32, i32
  }
  func.func @transform_1(%arg0: i32) -> (i32, i32) {
    %c0_i32 = arith.constant 0 : i32
    %c0_i32_0 = arith.constant 0 : i32
    return %arg0, %c0_i32 : i32, i32
  }
  func.func @transform_2(%arg0: i32) -> (i32, i32) {
    %c0_i32 = arith.constant 0 : i32
    %c0_i32_0 = arith.constant 0 : i32
    %c0_i32_1 = arith.constant 0 : i32
    return %c0_i32, %c0_i32_0 : i32, i32
  }
  func.func @transform_3(%arg0: i32) -> (i32, i32) {
    %c0_i32 = arith.constant 0 : i32
    %c0_i32_0 = arith.constant 0 : i32
    %c0_i32_1 = arith.constant 0 : i32
    return %c0_i32, %c0_i32_0 : i32, i32
  }
  func.func @transform_4(%arg0: i32) -> (i32, i32) {
    %c0_i32 = arith.constant 0 : i32
    %c0_i32_0 = arith.constant 0 : i32
    %c0_i32_1 = arith.constant 0 : i32
    return %c0_i32, %c0_i32_0 : i32, i32
  }
  func.func @transform_5(%arg0: i32) -> (i32, i32) {
    %c0_i32 = arith.constant 0 : i32
    %c0_i32_0 = arith.constant 0 : i32
    return %arg0, %c0_i32 : i32, i32
  }
}

</mosaic_0001>

<llo_original>
// kernel: tpu_custom_call.1
$region0: #{tpu_custom_call.1}
  #allocation0 [shape = 'u32[]', space=smem, size = 0x4, offset = 0x4, fixed_abs, tag = 'smem constant byte address 0x4 - core index']
  #allocation1 [shape = 'u32[144,128]{1,0:T(1,128)}', space=vmem, size = 0x12000, scoped, tag = 'internal scratch']
  %s0 = inlined_call_operand.hbm [shape: f32[8,16], index: 0, kind: input, shape index: {}]
  %s1 = inlined_call_operand.hbm [shape: f32[8,24], index: 1, kind: input, shape index: {}]
  %s2 = inlined_call_operand.hbm [shape: f32[16,32], index: 2, kind: input, shape index: {}]
  %s3 = inlined_call_operand.hbm [shape: f32[24,32], index: 3, kind: input, shape index: {}]
  %s4 = inlined_call_operand.vmem [shape: f32[1,32], index: 4, kind: input, shape index: {}]
  %s5 = inlined_call_operand.hbm [shape: f32[8,32], index: 5, kind: output, shape index: {}]
  %s6 = sld [smem:[#allocation0]]
  $region46: #{tpu_custom_call.1} parent=0
    _
  %s8 = ssub.s32 1, %s6
  %s9 = scalar_select 0, %s8, %s6
  $region1: #{tpu_custom_call.1} parent=0
    #allocation2 [shape = 'u8[4096]{0}', space=vmem, size = 0x1000, scoped, tag = 'input window, operand 0, single buffered']
    #allocation3 [shape = 's32[1]{0}', space=sflag, size = 0x4, scoped, tag = 'scoped memory for tpu_custom_call.1']
    #allocation4 [shape = 's32[1]{0}', space=sflag, size = 0x4, scoped, tag = 'scoped memory for tpu_custom_call.1']
    #allocation5 [shape = 'u8[4096]{0}', space=vmem, size = 0x1000, scoped, tag = 'input window, operand 1, single buffered']
    #allocation6 [shape = 's32[1]{0}', space=sflag, size = 0x4, scoped, tag = 'scoped memory for tpu_custom_call.1']
    #allocation7 [shape = 'u8[8192]{0}', space=vmem, size = 0x2000, scoped, tag = 'input window, operand 2, single buffered']
    #allocation8 [shape = 'u8[12288]{0}', space=vmem, size = 0x3000, scoped, tag = 'input window, operand 3, single buffered']
    #allocation9 [shape = 's32[1]{0}', space=sflag, size = 0x4, scoped, tag = 'scoped memory for tpu_custom_call.1']
    #allocation10 [shape = 'u8[4096]{0}', space=vmem, size = 0x1000, scoped, tag = 'output window, operand 0, single buffered']
    %10 = vsyncpa [#allocation3], 0
    %11 = vsyncpa [#allocation6], 0
    %12 = vsyncpa [#allocation9], 0
    %13 = vsyncpa [#allocation4], 0
    // Predicated region
    $region2: #{tpu_custom_call.1} parent=1 // pred_check
      _
    $region3: #{tpu_custom_call.1} parent=1 // pred_check_branch
      %15 = sbr.rel (0) target = $region5
    $region4: #{tpu_custom_call.1} parent=1 // pred_region
      %s17 = ssub.s32 128, 128
      %18 = vsyncadd [#allocation3], %s17
      %s20 = sshll.u32 [#allocation2], 4
      %s21 = int_to_ptr.vmem [resolvable:$true] %s20
      %23 = dma.hbm_to_vmem [thread:$0]  %s0, 128, %s21, [#allocation3]
    $region5: #{tpu_custom_call.1} parent=1 // pred_fallthru
      _
    // Predicated region
    $region6: #{tpu_custom_call.1} parent=1 // pred_check
      _
    $region7: #{tpu_custom_call.1} parent=1 // pred_check_branch
      %25 = sbr.rel (0) target = $region9
    $region8: #{tpu_custom_call.1} parent=1 // pred_region
      %s27 = ssub.s32 128, 128
      %28 = vsyncadd [#allocation6], %s27
      %s30 = sshll.u32 [#allocation5], 4
      %s31 = int_to_ptr.vmem [resolvable:$true] %s30
      %33 = dma.hbm_to_vmem [thread:$0]  %s1, 128, %s31, [#allocation6]
    $region9: #{tpu_custom_call.1} parent=1 // pred_fallthru
      _
    // Predicated region
    $region10: #{tpu_custom_call.1} parent=1 // pred_check
      _
    $region11: #{tpu_custom_call.1} parent=1 // pred_check_branch
      %35 = sbr.rel (0) target = $region13
    $region12: #{tpu_custom_call.1} parent=1 // pred_region
      %s37 = ssub.s32 256, 256
      %38 = vsyncadd [#allocation6], %s37
      %s39 = sshll.u32 [#allocation7], 4
      %s40 = int_to_ptr.vmem [resolvable:$true] %s39
      %45 = dma.hbm_to_vmem [thread:$0]  %s2, 256, %s40, [#allocation6], 128, 128, 8
    $region13: #{tpu_custom_call.1} parent=1 // pred_fallthru
      _
    // Predicated region
    $region14: #{tpu_custom_call.1} parent=1 // pred_check
      _
    $region15: #{tpu_custom_call.1} parent=1 // pred_check_branch
      %47 = sbr.rel (0) target = $region17
    $region16: #{tpu_custom_call.1} parent=1 // pred_region
      %s49 = ssub.s32 384, 384
      %50 = vsyncadd [#allocation9], %s49
      %s51 = sshll.u32 [#allocation8], 4
      %s52 = int_to_ptr.vmem [resolvable:$true] %s51
      %57 = dma.hbm_to_vmem [thread:$0]  %s3, 384, %s52, [#allocation9], 128, 128, 8
    $region17: #{tpu_custom_call.1} parent=1 // pred_fallthru
      _
    // Predicated region
    $region18: #{tpu_custom_call.1} parent=1 // pred_check
      _
    $region19: #{tpu_custom_call.1} parent=1 // pred_check_branch
      %59 = sbr.rel (0) target = $region21
    $region20: #{tpu_custom_call.1} parent=1 // pred_region
      _
    $region21: #{tpu_custom_call.1} parent=1 // pred_fallthru
      _
    // Predicated region
    $region22: #{tpu_custom_call.1} parent=1 // pred_check
      _
    $region23: #{tpu_custom_call.1} parent=1 // pred_check_branch
      %61 = sbr.rel (0) target = $region25
    $region24: #{tpu_custom_call.1} parent=1 // pred_region
      %62 = dma.done [#allocation3], 128
    $region25: #{tpu_custom_call.1} parent=1 // pred_fallthru
      _
    // Predicated region
    $region26: #{tpu_custom_call.1} parent=1 // pred_check
      _
    $region27: #{tpu_custom_call.1} parent=1 // pred_check_branch
      %64 = sbr.rel (0) target = $region29
    $region28: #{tpu_custom_call.1} parent=1 // pred_region
      %65 = dma.done [#allocation6], 128
    $region29: #{tpu_custom_call.1} parent=1 // pred_fallthru
      _
    // Predicated region
    $region30: #{tpu_custom_call.1} parent=1 // pred_check
      _
    $region31: #{tpu_custom_call.1} parent=1 // pred_check_branch
      %67 = sbr.rel (0) target = $region33
    $region32: #{tpu_custom_call.1} parent=1 // pred_region
      %68 = dma.done [#allocation6], 256
    $region33: #{tpu_custom_call.1} parent=1 // pred_fallthru
      _
    // Predicated region
    $region34: #{tpu_custom_call.1} parent=1 // pred_check
      _
    $region35: #{tpu_custom_call.1} parent=1 // pred_check_branch
      %70 = sbr.rel (0) target = $region37
    $region36: #{tpu_custom_call.1} parent=1 // pred_region
      %71 = dma.done [#allocation9], 384
    $region37: #{tpu_custom_call.1} parent=1 // pred_fallthru
      _
    %v72 = vld [vmem:[#allocation2] sm:$0xff]
    %v73 = vld [vmem:[#allocation7] sm:$0xff]
    %v74 = vld [vmem:[#allocation7 + $0x8] sm:$0xff]
    %v75 = vld [vmem:[#allocation5] sm:$0xff]
    %v76 = vld [vmem:[#allocation8] sm:$0xff]
    %v77 = vld [vmem:[#allocation8 + $0x8] sm:$0xff]
    %v78 = vld [vmem:[#allocation8 + $0x10] sm:$0xff]
    %vm79 = vcmask 195584
    %v81 = vsel %vm79, %v75, 0
    %83 = vmatprep.subr.mxu0 0.0
    %84 = vmatpush1.msra.mxu0 %v76
    %85 = vmatprep.subr.mxu0 0.0
    %86 = vmatpush1.msra.mxu0 %v77
    %87 = vmatprep.subr.mxu0 0.0
    %88 = vmatpush1.msra.mxu0 %v78
    %89 = vmatprep.subr.mxu0 0.0
    %90 = vmatpush1.msra.mxu0 0.0
    %91 = vmatprep.subr.mxu0 0.0
    %92 = vmatpush1.msra.mxu0 0.0
    %93 = vmatprep.subr.mxu0 0.0
    %94 = vmatpush1.msra.mxu0 0.0
    %95 = vmatprep.subr.mxu0 0.0
    %96 = vmatpush1.msra.mxu0 0.0
    %97 = vmatprep.subr.mxu0 0.0
    %98 = vmatpush1.msra.mxu0 0.0
    %99 = vmatprep.subr.mxu0 0.0
    %100 = vmatpush1.msra.mxu0 0.0
    %101 = vmatprep.subr.mxu0 0.0
    %102 = vmatpush1.msra.mxu0 0.0
    %103 = vmatprep.subr.mxu0 0.0
    %104 = vmatpush1.msra.mxu0 0.0
    %105 = vmatprep.subr.mxu0 0.0
    %106 = vmatpush1.msra.mxu0 0.0
    %107 = vmatprep.subr.mxu0 0.0
    %108 = vmatpush1.msra.mxu0 0.0
    %109 = vmatprep.subr.mxu0 0.0
    %110 = vmatpush1.msra.mxu0 0.0
    %111 = vmatprep.subr.mxu0 0.0
    %112 = vmatpush1.msra.mxu0 0.0
    %113 = vmatprep.subr.mxu0 0.0
    %114 = vmatpush1.msra.mxu0 0.0
    %115 = vmatprep.subr.mxu0 0.0
    %116 = vmatpush1.msra.mxu0 0.0
    %117 = vmatprep.subr.mxu0 0.0
    %118 = vmatpush1.msra.mxu0 0.0
    %119 = vmatprep.subr.mxu0 0.0
    %120 = vmatpush1.msra.mxu0 0.0
    %121 = vmatprep.subr.mxu0 0.0
    %122 = vmatpush1.msra.mxu0 0.0
    %123 = vmatprep.subr.mxu0 0.0
    %124 = vmatpush1.msra.mxu0 0.0
    %125 = vmatprep.subr.mxu0 0.0
    %126 = vmatpush1.msra.mxu0 0.0
    %127 = vmatprep.subr.mxu0 0.0
    %128 = vmatpush1.msra.mxu0 0.0
    %129 = vmatprep.subr.mxu0 0.0
    %130 = vmatpush1.msra.mxu0 0.0
    %131 = vmatprep.subr.mxu0 0.0
    %132 = vmatpush1.msra.mxu0 0.0
    %133 = vmatprep.subr.mxu0 0.0
    %134 = vmatpush1.msra.mxu0 0.0
    %135 = vmatprep.subr.mxu0 0.0
    %136 = vmatpush1.msra.mxu0 0.0
    %137 = vmatprep.subr.mxu0 0.0
    %138 = vmatpush1.msra.mxu0 0.0
    %139 = vmatprep.subr.mxu0 0.0
    %140 = vmatpush1.msra.mxu0 0.0
    %141 = vmatprep.subr.mxu0 0.0
    %142 = vmatpush1.msra.mxu0 0.0
    %143 = vmatprep.subr.mxu0 0.0
    %144 = vmatpush1.msra.mxu0 0.0
    %145 = vmatprep.subr.mxu0 0.0
    %146 = vmatpush1.msra.mxu0 0.0
    %147 = vmatprep.mubr.f32.mxu0 0.0
    %148 = vmatmul.mubr.f32.gmra.mrb[0].mxu0 %v81
    %v149 = vpop.f32.mrb[0].mxu0
    %v150 = vadd.f32 0.0, %v149
    %v151 = vpop.f32.mrb[0].mxu0
    %152 = vdwg.mxu0
    %vm153 = vcmask 130048
    %v155 = vsel %vm153, %v72, 0
    %157 = vmatprep.subr.mxu0 0.0
    %158 = vmatpush1.msra.mxu0 %v73
    %159 = vmatprep.subr.mxu0 0.0
    %160 = vmatpush1.msra.mxu0 %v74
    %161 = vmatprep.subr.mxu0 0.0
    %162 = vmatpush1.msra.mxu0 0.0
    %163 = vmatprep.subr.mxu0 0.0
    %164 = vmatpush1.msra.mxu0 0.0
    %165 = vmatprep.subr.mxu0 0.0
    %166 = vmatpush1.msra.mxu0 0.0
    %167 = vmatprep.subr.mxu0 0.0
    %168 = vmatpush1.msra.mxu0 0.0
    %169 = vmatprep.subr.mxu0 0.0
    %170 = vmatpush1.msra.mxu0 0.0
    %171 = vmatprep.subr.mxu0 0.0
    %172 = vmatpush1.msra.mxu0 0.0
    %173 = vmatprep.subr.mxu0 0.0
    %174 = vmatpush1.msra.mxu0 0.0
    %175 = vmatprep.subr.mxu0 0.0
    %176 = vmatpush1.msra.mxu0 0.0
    %177 = vmatprep.subr.mxu0 0.0
    %178 = vmatpush1.msra.mxu0 0.0
    %179 = vmatprep.subr.mxu0 0.0
    %180 = vmatpush1.msra.mxu0 0.0
    %181 = vmatprep.subr.mxu0 0.0
    %182 = vmatpush1.msra.mxu0 0.0
    %183 = vmatprep.subr.mxu0 0.0
    %184 = vmatpush1.msra.mxu0 0.0
    %185 = vmatprep.subr.mxu0 0.0
    %186 = vmatpush1.msra.mxu0 0.0
    %187 = vmatprep.subr.mxu0 0.0
    %188 = vmatpush1.msra.mxu0 0.0
    %189 = vmatprep.subr.mxu0 0.0
    %190 = vmatpush1.msra.mxu0 0.0
    %191 = vmatprep.subr.mxu0 0.0
    %192 = vmatpush1.msra.mxu0 0.0
    %193 = vmatprep.subr.mxu0 0.0
    %194 = vmatpush1.msra.mxu0 0.0
    %195 = vmatprep.subr.mxu0 0.0
    %196 = vmatpush1.msra.mxu0 0.0
    %197 = vmatprep.subr.mxu0 0.0
    %198 = vmatpush1.msra.mxu0 0.0
    %199 = vmatprep.subr.mxu0 0.0
    %200 = vmatpush1.msra.mxu0 0.0
    %201 = vmatprep.subr.mxu0 0.0
    %202 = vmatpush1.msra.mxu0 0.0
    %203 = vmatprep.subr.mxu0 0.0
    %204 = vmatpush1.msra.mxu0 0.0
    %205 = vmatprep.subr.mxu0 0.0
    %206 = vmatpush1.msra.mxu0 0.0
    %207 = vmatprep.subr.mxu0 0.0
    %208 = vmatpush1.msra.mxu0 0.0
    %209 = vmatprep.subr.mxu0 0.0
    %210 = vmatpush1.msra.mxu0 0.0
    %211 = vmatprep.subr.mxu0 0.0
    %212 = vmatpush1.msra.mxu0 0.0
    %213 = vmatprep.subr.mxu0 0.0
    %214 = vmatpush1.msra.mxu0 0.0
    %215 = vmatprep.subr.mxu0 0.0
    %216 = vmatpush1.msra.mxu0 0.0
    %217 = vmatprep.subr.mxu0 0.0
    %218 = vmatpush1.msra.mxu0 0.0
    %219 = vmatprep.subr.mxu0 0.0
    %220 = vmatpush1.msra.mxu0 0.0
    %221 = vmatprep.mubr.f32.mxu0 0.0
    %222 = vmatmul.mubr.f32.gmra.mrb[0].mxu0 %v155
    %v223 = vpop.f32.mrb[0].mxu0
    %v224 = vadd.f32 %v150, %v223
    %v225 = vpop.f32.mrb[0].mxu0
    %226 = vdwg.mxu0
    %v227 = vld [vmem:[%s4] sm:$0x1]
    %v229 = vlaneseq
    %v230 = vshrl.u32 %v229, 7
    %v231 = vsub.s32 0, %v230
    %v232 = vrot.slane %v227, %v231
    %v234 = vadd.f32 %v224, %v232
    %vm235 = vcmask 261120
    %236 = vst.msk [vmem:[#allocation10] sm:$0xff] %vm235, %v234
    // Predicated region
    $region38: #{tpu_custom_call.1} parent=1 // pred_check
      _
    $region39: #{tpu_custom_call.1} parent=1 // pred_check_branch
      %238 = sbr.rel (0) target = $region41
    $region40: #{tpu_custom_call.1} parent=1 // pred_region
      %s240 = ssub.s32 128, 128
      %241 = vsyncadd [#allocation4], %s240
      %s243 = sshll.u32 [#allocation10], 4
      %s244 = int_to_ptr.vmem [resolvable:$true] %s243
      %246 = dma.vmem_to_hbm [thread:$0]  %s244, 128, %s5, [#allocation4]
    $region41: #{tpu_custom_call.1} parent=1 // pred_fallthru
      _
    // Predicated region
    $region42: #{tpu_custom_call.1} parent=1 // pred_check
      _
    $region43: #{tpu_custom_call.1} parent=1 // pred_check_branch
      %248 = sbr.rel (0) target = $region45
    $region44: #{tpu_custom_call.1} parent=1 // pred_region
      %249 = dma.done [#allocation4], 128
    $region45: #{tpu_custom_call.1} parent=1 // pred_fallthru
      _
    %250 = vsyncpa [#allocation3], 1
    %251 = vsyncpa [#allocation6], 1
    %252 = vsyncpa [#allocation9], 1
    %253 = vsyncpa [#allocation4], 1

</llo_original>
